<compile_context>
chip_gen: v7x
topology: tpu7x:2x2x1
jax: 0.10.0
libtpu: 0.0.40
codegen_flags: <defaults>
</compile_context>

<pallas_src>
import jax
import jax.numpy as jnp
from jax import lax
from jax.experimental import pallas as pl
from jax.experimental.pallas import tpu as pltpu


def policy_head_kernel(featT_ref, wab_ref, bab_ref, value_ref, action_ref, logp_ref):
    # featT_ref: [H, TB] (batch on lanes); wab_ref: [A+1, H]; bab_ref: [A+1, 1]
    featsT = featT_ref[...]
    a1 = wab_ref.shape[0]
    n_act = a1 - 1

    # Single fused MXU matmul: rows 0..A-1 = actor logits, row A = critic value.
    fused = jnp.dot(wab_ref[...], featsT,
                    preferred_element_type=jnp.float32) + bab_ref[...]   # [A+1, TB]

    logits = fused[:n_act, :]        # [A, TB]
    value = fused[n_act:a1, :]       # [1, TB]

    # log-softmax pieces over the action (sublane) axis; exp/log go to the EUP.
    maxv = jnp.max(logits, axis=0, keepdims=True)                         # [1, TB]
    lse = jnp.log(jnp.sum(jnp.exp(logits - maxv), axis=0, keepdims=True)) # [1, TB]

    # deterministic action = argmax (first occurrence on ties, matches jnp.argmax)
    row = lax.broadcasted_iota(jnp.int32, logits.shape, 0)                # [A, TB]
    is_max = logits >= maxv
    action = jnp.min(jnp.where(is_max, row, jnp.int32(n_act)),
                     axis=0, keepdims=True)                               # [1, TB]

    value_ref[...] = value
    action_ref[...] = action
    # log_softmax at the argmax is exactly -lse (the shifted logit there is 0).
    logp_ref[...] = -lse


def _pick_batch_tile(batch):
    for tb in (1024, 512, 256, 128):
        if batch % tb == 0:
            return tb
    return batch  # single full-array tile (always legal)


def policy_oracle_act(features, wab, bab):
    """features: [B, H] f32; wab: [A+1, H] (actor rows then critic row); bab: [A+1, 1]."""
    B, H = features.shape
    a1 = wab.shape[0]
    tb = _pick_batch_tile(B)
    grid = (B // tb,)

    # Put batch on lanes so all kernel outputs are lane-dense [1, TB] rows.
    featT = features.T  # [H, B]

    value_t, action_t, logp_t = pl.pallas_call(
        policy_head_kernel,
        out_shape=(
            jax.ShapeDtypeStruct((1, B), jnp.float32),   # value
            jax.ShapeDtypeStruct((1, B), jnp.int32),     # action
            jax.ShapeDtypeStruct((1, B), jnp.float32),   # action_log_probs
        ),
        grid=grid,
        in_specs=[
            pl.BlockSpec((H, tb), lambda i: (0, i)),     # feature tile (pipelined)
            pl.BlockSpec((a1, H), lambda i: (0, 0)),     # resident fused weights
            pl.BlockSpec((a1, 1), lambda i: (0, 0)),     # resident fused bias
        ],
        out_specs=(
            pl.BlockSpec((1, tb), lambda i: (0, i)),
            pl.BlockSpec((1, tb), lambda i: (0, i)),
            pl.BlockSpec((1, tb), lambda i: (0, i)),
        ),
        compiler_params=pltpu.CompilerParams(
            dimension_semantics=("parallel",)),          # shards across TCs on v7x
    )(featT, wab, bab)

    # Back to the module's [B, 1] layout (cheap wrapper-side reshape/transpose).
    return value_t.T, action_t.T, logp_t.T


def orthogonal_init(key, shape, gain=1.0):
    rows, cols = shape
    n = max(rows, cols)
    a = jax.random.normal(key, (n, n), dtype=jnp.float32)
    q, r = jnp.linalg.qr(a)
    q = q * jnp.sign(jnp.diag(r))[None, :]
    return gain * q[:rows, :cols]


if __name__ == "__main__":
    B, H, A = 8, 32, 4          # batch, net.output_size, dim_actions
    key = jax.random.PRNGKey(0)
    k_feat, k_wa, k_wc = jax.random.split(key, 3)

    # "net" output features (backbone not reproduced; see TODO above)
    features = jax.random.normal(k_feat, (B, H), dtype=jnp.float32)

    # CategoricalNet: Linear(H, A), orthogonal init gain=0.01, zero bias
    wa = orthogonal_init(k_wa, (A, H), gain=0.01)     # torch weight [A, H]
    ba = jnp.zeros((A,), dtype=jnp.float32)

    # CriticHead: Linear(H, 1), orthogonal init, zero bias
    wc = orthogonal_init(k_wc, (1, H), gain=1.0)      # torch weight [1, H]
    bc = jnp.zeros((1,), dtype=jnp.float32)

    # Fused head parameters: actor rows stacked on top of the critic row.
    wab = jnp.concatenate([wa, wc], axis=0)           # [A+1, H]
    bab = jnp.concatenate([ba, bc], axis=0)[:, None]  # [A+1, 1]

    value, action, action_log_probs = policy_oracle_act(features, wab, bab)
    jax.block_until_ready((value, action, action_log_probs))

    # sanity check against pure-JAX reference (un-fused, original layout)
    logits_ref = features @ wa.T + ba[None, :]
    value_ref = features @ wc.T + bc[None, :]
    logp_full = jax.nn.log_softmax(logits_ref, axis=-1)
    action_ref = jnp.argmax(logits_ref, axis=-1)[:, None]
    alp_ref = jnp.take_along_axis(logp_full, action_ref, axis=-1)

    assert jnp.allclose(value, value_ref, atol=1e-5)
    assert jnp.array_equal(action, action_ref.astype(jnp.int32))
    assert jnp.allclose(action_log_probs, alp_ref, atol=1e-5)

    print("KERNEL_OK")
</pallas_src>

<mosaic_0001>
module attributes {stable_mosaic.version = 11 : i64} {
  func.func @policy_head_kernel(%arg0: i32, %arg1: memref<32x8xf32, #tpu.memory_space<vmem>>, %arg2: memref<5x32xf32, #tpu.memory_space<vmem>>, %arg3: memref<5x1xf32, #tpu.memory_space<vmem>>, %arg4: memref<1x8xf32, #tpu.memory_space<vmem>>, %arg5: memref<1x8xi32, #tpu.memory_space<vmem>>, %arg6: memref<1x8xf32, #tpu.memory_space<vmem>>) attributes {dimension_semantics = [#tpu.dimension_semantics<parallel>], iteration_bounds = array<i64: 1>, scalar_prefetch = 0 : i64, scratch_operands = 0 : i64, tpu.core_type = #tpu.core_type<tc>, window_params = [{transform_indices = @transform_0, window_bounds = array<i64: 32, 8>}, {pipeline_mode = #tpu.pipeline_mode<synchronous>, transform_indices = @transform_1, window_bounds = array<i64: 5, 32>}, {pipeline_mode = #tpu.pipeline_mode<synchronous>, transform_indices = @transform_2, window_bounds = array<i64: 5, 1>}, {transform_indices = @transform_3, window_bounds = array<i64: 1, 8>}, {transform_indices = @transform_4, window_bounds = array<i64: 1, 8>}, {transform_indices = @transform_5, window_bounds = array<i64: 1, 8>}]} {
    %c0 = arith.constant 0 : index
    %c0_0 = arith.constant 0 : index
    %0 = vector.load %arg1[%c0, %c0_0] : memref<32x8xf32, #tpu.memory_space<vmem>>, vector<32x8xf32>
    %c0_1 = arith.constant 0 : index
    %c0_2 = arith.constant 0 : index
    %1 = vector.load %arg2[%c0_1, %c0_2] : memref<5x32xf32, #tpu.memory_space<vmem>>, vector<5x32xf32>
    %cst = arith.constant dense<0.000000e+00> : vector<5x8xf32>
    %2 = tpu.matmul %1, %0, %cst {dimension_numbers = #tpu.dot_dimension_numbers<[1], [0], [0], [1], [0, 0, 1, 1], [], []>} : vector<5x32xf32>, vector<32x8xf32>, vector<5x8xf32> -> vector<5x8xf32>
    %c0_3 = arith.constant 0 : index
    %c0_4 = arith.constant 0 : index
    %3 = vector.load %arg3[%c0_3, %c0_4] : memref<5x1xf32, #tpu.memory_space<vmem>>, vector<5x1xf32>
    %4 = vector.broadcast %3 : vector<5x1xf32> to vector<5x8xf32>
    %5 = arith.addf %2, %4 : vector<5x8xf32>
    %6 = vector.extract_strided_slice %5 {offsets = [0, 0], sizes = [4, 8], strides = [1, 1]} : vector<5x8xf32> to vector<4x8xf32>
    %7 = vector.extract_strided_slice %5 {offsets = [4, 0], sizes = [1, 8], strides = [1, 1]} : vector<5x8xf32> to vector<1x8xf32>
    %cst_5 = arith.constant dense<0xFF800000> : vector<8xf32>
    %8 = vector.multi_reduction <maximumf>, %6, %cst_5 [0] : vector<4x8xf32> to vector<8xf32>
    %9 = vector.shape_cast %8 : vector<8xf32> to vector<1x8xf32>
    %10 = vector.broadcast %9 : vector<1x8xf32> to vector<4x8xf32>
    %11 = arith.subf %6, %10 : vector<4x8xf32>
    %12 = math.exp %11 : vector<4x8xf32>
    %cst_6 = arith.constant dense<0.000000e+00> : vector<8xf32>
    %13 = vector.multi_reduction <add>, %12, %cst_6 [0] : vector<4x8xf32> to vector<8xf32>
    %14 = vector.shape_cast %13 : vector<8xf32> to vector<1x8xf32>
    %15 = math.log %14 : vector<1x8xf32>
    %16 = tpu.iota {dimensions = array<i32: 0>} : vector<4x8xi32>
    %17 = vector.broadcast %9 : vector<1x8xf32> to vector<4x8xf32>
    %18 = arith.cmpf oge, %6, %17 : vector<4x8xf32>
    %c4_i32 = arith.constant 4 : i32
    %19 = vector.broadcast %c4_i32 : i32 to vector<4x8xi32>
    %20 = arith.select %18, %16, %19 : vector<4x8xi1>, vector<4x8xi32>
    %cst_7 = arith.constant dense<2147483647> : vector<8xi32>
    %21 = vector.multi_reduction <minsi>, %20, %cst_7 [0] : vector<4x8xi32> to vector<8xi32>
    %22 = vector.shape_cast %21 : vector<8xi32> to vector<1x8xi32>
    %c0_8 = arith.constant 0 : index
    %c0_9 = arith.constant 0 : index
    %23 = vector.load %arg4[%c0_8, %c0_9] : memref<1x8xf32, #tpu.memory_space<vmem>>, vector<1x8xf32>
    tpu.vector_store %arg4[%c0_8, %c0_9], %7 {strides = array<i32>} : memref<1x8xf32, #tpu.memory_space<vmem>>, vector<1x8xf32>,
    %c0_10 = arith.constant 0 : index
    %c0_11 = arith.constant 0 : index
    %24 = vector.load %arg5[%c0_10, %c0_11] : memref<1x8xi32, #tpu.memory_space<vmem>>, vector<1x8xi32>
    tpu.vector_store %arg5[%c0_10, %c0_11], %22 {strides = array<i32>} : memref<1x8xi32, #tpu.memory_space<vmem>>, vector<1x8xi32>,
    %cst_12 = arith.constant 0.000000e+00 : f32
    %25 = vector.broadcast %cst_12 : f32 to vector<1x8xf32>
    %26 = arith.subf %25, %15 : vector<1x8xf32>
    %c0_13 = arith.constant 0 : index
    %c0_14 = arith.constant 0 : index
    %27 = vector.load %arg6[%c0_13, %c0_14] : memref<1x8xf32, #tpu.memory_space<vmem>>, vector<1x8xf32>
    tpu.vector_store %arg6[%c0_13, %c0_14], %26 {strides = array<i32>} : memref<1x8xf32, #tpu.memory_space<vmem>>, vector<1x8xf32>,
    return
  }
  func.func @transform_0(%arg0: i32) -> (i32, i32) {
    %c0_i32 = arith.constant 0 : i32
    %c0_i32_0 = arith.constant 0 : i32
    return %c0_i32, %arg0 : i32, i32
  }
  func.func @transform_1(%arg0: i32) -> (i32, i32) {
    %c0_i32 = arith.constant 0 : i32
    %c0_i32_0 = arith.constant 0 : i32
    %c0_i32_1 = arith.constant 0 : i32
    return %c0_i32, %c0_i32_0 : i32, i32
  }
  func.func @transform_2(%arg0: i32) -> (i32, i32) {
    %c0_i32 = arith.constant 0 : i32
    %c0_i32_0 = arith.constant 0 : i32
    %c0_i32_1 = arith.constant 0 : i32
    return %c0_i32, %c0_i32_0 : i32, i32
  }
  func.func @transform_3(%arg0: i32) -> (i32, i32) {
    %c0_i32 = arith.constant 0 : i32
    %c0_i32_0 = arith.constant 0 : i32
    return %c0_i32, %arg0 : i32, i32
  }
  func.func @transform_4(%arg0: i32) -> (i32, i32) {
    %c0_i32 = arith.constant 0 : i32
    %c0_i32_0 = arith.constant 0 : i32
    return %c0_i32, %arg0 : i32, i32
  }
  func.func @transform_5(%arg0: i32) -> (i32, i32) {
    %c0_i32 = arith.constant 0 : i32
    %c0_i32_0 = arith.constant 0 : i32
    return %c0_i32, %arg0 : i32, i32
  }
}

</mosaic_0001>

<llo_original>
// kernel: tpu_custom_call.1
$region0: #{tpu_custom_call.1}
  #allocation0 [shape = 'u32[]', space=smem, size = 0x4, offset = 0x4, fixed_abs, tag = 'smem constant byte address 0x4 - core index']
  #allocation1 [shape = 'u32[144,128]{1,0:T(1,128)}', space=vmem, size = 0x12000, scoped, tag = 'internal scratch']
  %s0 = inlined_call_operand.vmem [shape: f32[32,8], index: 0, kind: input, shape index: {}]
  %s1 = inlined_call_operand.vmem [shape: f32[5,32], index: 1, kind: input, shape index: {}]
  %s2 = inlined_call_operand.vmem [shape: f32[5,1], index: 2, kind: input, shape index: {}]
  %s3 = inlined_call_operand.hbm [shape: f32[1,8], index: 3, kind: output, shape index: {0}]
  %s4 = inlined_call_operand.hbm [shape: s32[1,8], index: 4, kind: output, shape index: {1}]
  %s5 = inlined_call_operand.hbm [shape: f32[1,8], index: 5, kind: output, shape index: {2}]
  %6 = xla_tuple %s3, %s4, %s5
  %s7 = sld [smem:[#allocation0]]
  $region38: #{tpu_custom_call.1} parent=0
    _
  %s9 = ssub.s32 1, %s7
  %s10 = scalar_select 0, %s9, %s7
  $region1: #{tpu_custom_call.1} parent=0
    #allocation2 [shape = 'u8[512]{0}', space=vmem, size = 0x400, scoped, tag = 'output window, operand 0, single buffered']
    #allocation3 [shape = 's32[1]{0}', space=sflag, size = 0x4, scoped, tag = 'scoped memory for tpu_custom_call.1']
    #allocation4 [shape = 'u8[512]{0}', space=vmem, size = 0x400, scoped, tag = 'output window, operand 1, single buffered']
    #allocation5 [shape = 's32[1]{0}', space=sflag, size = 0x4, scoped, tag = 'scoped memory for tpu_custom_call.1']
    #allocation6 [shape = 'u8[512]{0}', space=vmem, size = 0x400, scoped, tag = 'output window, operand 2, single buffered']
    %11 = vsyncpa [#allocation3], 0
    %12 = vsyncpa [#allocation5], 0
    // Predicated region
    $region2: #{tpu_custom_call.1} parent=1 // pred_check
      _
    $region3: #{tpu_custom_call.1} parent=1 // pred_check_branch
      %14 = sbr.rel (0) target = $region5
    $region4: #{tpu_custom_call.1} parent=1 // pred_region
      _
    $region5: #{tpu_custom_call.1} parent=1 // pred_fallthru
      _
    // Predicated region
    $region6: #{tpu_custom_call.1} parent=1 // pred_check
      _
    $region7: #{tpu_custom_call.1} parent=1 // pred_check_branch
      %16 = sbr.rel (0) target = $region9
    $region8: #{tpu_custom_call.1} parent=1 // pred_region
      _
    $region9: #{tpu_custom_call.1} parent=1 // pred_fallthru
      _
    // Predicated region
    $region10: #{tpu_custom_call.1} parent=1 // pred_check
      _
    $region11: #{tpu_custom_call.1} parent=1 // pred_check_branch
      %18 = sbr.rel (0) target = $region13
    $region12: #{tpu_custom_call.1} parent=1 // pred_region
      _
    $region13: #{tpu_custom_call.1} parent=1 // pred_fallthru
      _
    %v19 = vld [vmem:[%s0] sm:$0xff]
    %v20 = vld [vmem:[%s0 + $0x8] sm:$0xff]
    %v21 = vld [vmem:[%s0 + $0x10] sm:$0xff]
    %v22 = vld [vmem:[%s0 + $0x18] sm:$0xff]
    %v23 = vld [vmem:[%s1] sm:$0x1f]
    %v24 = vld [vmem:[%s2] sm:$0x1f]
    %26 = vset.pattern.permute.xlu0 0
    %27 = vperm.xlu0 %26, %v24
    %v28 = vpop.permute.xlu0 %27
    %vm30 = vcmask 261120
    %v32 = vsel %vm30, %v23, 0
    %34 = vmatprep.subr.mxu0 0.0
    %35 = vmatpush1.msra.mxu0 %v19
    %36 = vmatprep.subr.mxu0 0.0
    %37 = vmatpush1.msra.mxu0 %v20
    %38 = vmatprep.subr.mxu0 0.0
    %39 = vmatpush1.msra.mxu0 %v21
    %40 = vmatprep.subr.mxu0 0.0
    %41 = vmatpush1.msra.mxu0 %v22
    %42 = vmatprep.subr.mxu0 0.0
    %43 = vmatpush1.msra.mxu0 0.0
    %44 = vmatprep.subr.mxu0 0.0
    %45 = vmatpush1.msra.mxu0 0.0
    %46 = vmatprep.subr.mxu0 0.0
    %47 = vmatpush1.msra.mxu0 0.0
    %48 = vmatprep.subr.mxu0 0.0
    %49 = vmatpush1.msra.mxu0 0.0
    %50 = vmatprep.subr.mxu0 0.0
    %51 = vmatpush1.msra.mxu0 0.0
    %52 = vmatprep.subr.mxu0 0.0
    %53 = vmatpush1.msra.mxu0 0.0
    %54 = vmatprep.subr.mxu0 0.0
    %55 = vmatpush1.msra.mxu0 0.0
    %56 = vmatprep.subr.mxu0 0.0
    %57 = vmatpush1.msra.mxu0 0.0
    %58 = vmatprep.subr.mxu0 0.0
    %59 = vmatpush1.msra.mxu0 0.0
    %60 = vmatprep.subr.mxu0 0.0
    %61 = vmatpush1.msra.mxu0 0.0
    %62 = vmatprep.subr.mxu0 0.0
    %63 = vmatpush1.msra.mxu0 0.0
    %64 = vmatprep.subr.mxu0 0.0
    %65 = vmatpush1.msra.mxu0 0.0
    %66 = vmatprep.subr.mxu0 0.0
    %67 = vmatpush1.msra.mxu0 0.0
    %68 = vmatprep.subr.mxu0 0.0
    %69 = vmatpush1.msra.mxu0 0.0
    %70 = vmatprep.subr.mxu0 0.0
    %71 = vmatpush1.msra.mxu0 0.0
    %72 = vmatprep.subr.mxu0 0.0
    %73 = vmatpush1.msra.mxu0 0.0
    %74 = vmatprep.subr.mxu0 0.0
    %75 = vmatpush1.msra.mxu0 0.0
    %76 = vmatprep.subr.mxu0 0.0
    %77 = vmatpush1.msra.mxu0 0.0
    %78 = vmatprep.subr.mxu0 0.0
    %79 = vmatpush1.msra.mxu0 0.0
    %80 = vmatprep.subr.mxu0 0.0
    %81 = vmatpush1.msra.mxu0 0.0
    %82 = vmatprep.subr.mxu0 0.0
    %83 = vmatpush1.msra.mxu0 0.0
    %84 = vmatprep.subr.mxu0 0.0
    %85 = vmatpush1.msra.mxu0 0.0
    %86 = vmatprep.subr.mxu0 0.0
    %87 = vmatpush1.msra.mxu0 0.0
    %88 = vmatprep.subr.mxu0 0.0
    %89 = vmatpush1.msra.mxu0 0.0
    %90 = vmatprep.subr.mxu0 0.0
    %91 = vmatpush1.msra.mxu0 0.0
    %92 = vmatprep.subr.mxu0 0.0
    %93 = vmatpush1.msra.mxu0 0.0
    %94 = vmatprep.subr.mxu0 0.0
    %95 = vmatpush1.msra.mxu0 0.0
    %96 = vmatprep.subr.mxu0 0.0
    %97 = vmatpush1.msra.mxu0 0.0
    %98 = vmatprep.mubr.f32.mxu0 0.0
    %99 = vmatmul.mubr.f32.gmra.mrb[0].mxu0 %v32
    %v100 = vpop.f32.mrb[0].mxu0
    %v101 = vadd.f32 %v28, %v100
    %v102 = vpop.f32.mrb[0].mxu0
    %103 = vdwg.mxu0
    %vm104 = vcmask 60416
    %v105 = vsel %vm104, %v101, -inf
    %v106 = vrot.slane %v105, 4
    %v107 = vmax.f32 %v105, %v106
    %v108 = vrot.slane %v107, 2
    %v109 = vmax.f32 %v107, %v108
    %v110 = vrot.slane %v109, 1
    %v111 = vmax.f32 %v109, %v110
    %v112 = vsub.f32 %v101, %v111
    %v113 = vmul.f32 %v112, 1.442695
    %v114 = vpow.pop %v113
    %v115 = vsel %vm104, %v114, 0.0
    %v116 = vrot.slane %v115, 4
    %v117 = vadd.f32 %v115, %v116
    %v118 = vrot.slane %v117, 2
    %v119 = vadd.f32 %v117, %v118
    %v120 = vrot.slane %v119, 1
    %v121 = vadd.f32 %v119, %v120
    %v122 = vlog2.pop %v121
    %v123 = vmul.f32 %v122, 0.6931472
    %v124 = vlaneseq
    %v125 = vshrl.u32 %v124, 7
    %vm126 = vcmp.ge.f32.partialorder %v101, %v111
    %v127 = vsel %vm126, %v125, 4
    %v128 = vsel %vm104, %v127, 2147483647
    %v129 = vrot.slane %v128, 4
    %vm130 = vcmp.lt.s32.totalorder %v128, %v129
    %v131 = vsel %vm130, %v128, %v129
    %v132 = vrot.slane %v131, 2
    %vm133 = vcmp.lt.s32.totalorder %v131, %v132
    %v134 = vsel %vm133, %v131, %v132
    %v135 = vrot.slane %v134, 1
    %vm136 = vcmp.lt.s32.totalorder %v134, %v135
    %v137 = vsel %vm136, %v134, %v135
    %vm138 = vcmask 61444
    %139 = vst.msk [vmem:[#allocation2 - $0x4] sm:$0x10] %vm138, %v101
    %vm140 = vcmask 57344
    %141 = vst.msk [vmem:[#allocation4] sm:$0x1] %vm140, %v137
    %v142 = vsub.f32 0.0, %v123
    %143 = vst.msk [vmem:[#allocation6] sm:$0x1] %vm140, %v142
    // Predicated region
    $region14: #{tpu_custom_call.1} parent=1 // pred_check
      _
    $region15: #{tpu_custom_call.1} parent=1 // pred_check_branch
      %145 = sbr.rel (0) target = $region17
    $region16: #{tpu_custom_call.1} parent=1 // pred_region
      %s147 = ssub.s32 16, 16
      %148 = vsyncadd [#allocation3], %s147
      %s150 = sshll.u32 [#allocation2], 4
      %s151 = int_to_ptr.vmem [resolvable:$true] %s150
      %153 = dma.vmem_to_hbm [thread:$0]  %s151, 16, %s3, [#allocation3]
    $region17: #{tpu_custom_call.1} parent=1 // pred_fallthru
      _
    // Predicated region
    $region18: #{tpu_custom_call.1} parent=1 // pred_check
      _
    $region19: #{tpu_custom_call.1} parent=1 // pred_check_branch
      %155 = sbr.rel (0) target = $region21
    $region20: #{tpu_custom_call.1} parent=1 // pred_region
      %s157 = ssub.s32 16, 16
      %158 = vsyncadd [#allocation5], %s157
      %s160 = sshll.u32 [#allocation4], 4
      %s161 = int_to_ptr.vmem [resolvable:$true] %s160
      %163 = dma.vmem_to_hbm [thread:$0]  %s161, 16, %s4, [#allocation5]
    $region21: #{tpu_custom_call.1} parent=1 // pred_fallthru
      _
    // Predicated region
    $region22: #{tpu_custom_call.1} parent=1 // pred_check
      _
    $region23: #{tpu_custom_call.1} parent=1 // pred_check_branch
      %165 = sbr.rel (0) target = $region25
    $region24: #{tpu_custom_call.1} parent=1 // pred_region
      %s167 = ssub.s32 16, 16
      %168 = vsyncadd [#allocation5], %s167
      %s170 = sshll.u32 [#allocation6], 4
      %s171 = int_to_ptr.vmem [resolvable:$true] %s170
      %173 = dma.vmem_to_hbm [thread:$0]  %s171, 16, %s5, [#allocation5]
    $region25: #{tpu_custom_call.1} parent=1 // pred_fallthru
      _
    // Predicated region
    $region26: #{tpu_custom_call.1} parent=1 // pred_check
      _
    $region27: #{tpu_custom_call.1} parent=1 // pred_check_branch
      %175 = sbr.rel (0) target = $region29
    $region28: #{tpu_custom_call.1} parent=1 // pred_region
      %176 = dma.done [#allocation3], 16
    $region29: #{tpu_custom_call.1} parent=1 // pred_fallthru
      _
    // Predicated region
    $region30: #{tpu_custom_call.1} parent=1 // pred_check
      _
    $region31: #{tpu_custom_call.1} parent=1 // pred_check_branch
      %178 = sbr.rel (0) target = $region33
    $region32: #{tpu_custom_call.1} parent=1 // pred_region
      %179 = dma.done [#allocation5], 16
    $region33: #{tpu_custom_call.1} parent=1 // pred_fallthru
      _
    // Predicated region
    $region34: #{tpu_custom_call.1} parent=1 // pred_check
      _
    $region35: #{tpu_custom_call.1} parent=1 // pred_check_branch
      %181 = sbr.rel (0) target = $region37
    $region36: #{tpu_custom_call.1} parent=1 // pred_region
      %182 = dma.done [#allocation5], 16
    $region37: #{tpu_custom_call.1} parent=1 // pred_fallthru
      _
    %183 = vsyncpa [#allocation3], 1
    %184 = vsyncpa [#allocation5], 1

</llo_original>
